<compile_context>
chip_gen: v7x
topology: tpu7x:2x2x1
jax: 0.10.0
libtpu: 0.0.40
codegen_flags: <defaults>
</compile_context>

<pallas_src>
import functools

import jax
import jax.numpy as jnp
from jax.experimental import pallas as pl
from jax.experimental.pallas import tpu as pltpu


def _prescale_norm_kernel(g_ref, x_ref, o_ref, *, eps):
    # g_ref: (1,) f32 in SMEM; x_ref/o_ref: (block_rows, D) tiles in VMEM.
    x = x_ref[...].astype(jnp.float32)
    ss = jnp.sum(x * x, axis=-1, keepdims=True)          # (TR, 1) lane reduce
    n = jnp.maximum(jnp.sqrt(ss), eps)                   # torch.norm(...).clamp(min=eps)
    scale = g_ref[0] / n                                 # divide only the (TR,1) column
    o_ref[...] = (x * scale).astype(o_ref.dtype)         # single lane-dense store


def pre_scale_norm(x, g, *, eps=1e-5, fn=None, vmem_budget_bytes=4 << 20):
    """Pallas equivalent of PreScaleNorm(dim, fn, eps)(x): fn(x / ||x||.clamp(eps) * g)."""
    orig_shape = x.shape
    d = orig_shape[-1]
    rows = 1
    for s in orig_shape[:-1]:
        rows *= s
    x2 = x.reshape(rows, d)
    g1 = jnp.asarray(g, dtype=jnp.float32).reshape(1)

    # Largest multiple-of-8 row tile that keeps the (double-buffered) in+out
    # tiles comfortably inside the scoped VMEM budget.
    bytes_per_row = d * jnp.dtype(x.dtype).itemsize
    max_rows = max(8, (vmem_budget_bytes // max(1, bytes_per_row)) // 8 * 8)
    block_rows = min(rows, max_rows)
    if rows >= 8:
        block_rows = max(8, (block_rows // 8) * 8)
    grid = (pl.cdiv(rows, block_rows),)

    out2 = pl.pallas_call(
        functools.partial(_prescale_norm_kernel, eps=eps),
        out_shape=jax.ShapeDtypeStruct((rows, d), x.dtype),
        grid=grid,
        in_specs=[
            pl.BlockSpec(memory_space=pltpu.MemorySpace.SMEM),      # g (scalar param)
            pl.BlockSpec((block_rows, d), lambda i: (i, 0)),        # x row tile
        ],
        out_specs=pl.BlockSpec((block_rows, d), lambda i: (i, 0)),
        compiler_params=pltpu.CompilerParams(
            dimension_semantics=("parallel",)),
    )(g1, x2)

    out = out2.reshape(orig_shape)
    # TODO(synk): self.fn is an arbitrary wrapped sub-module; it is applied here
    # as an external JAX callable (identity by default), not fused into the kernel.
    return fn(out) if fn is not None else out


def _reference(x, g, eps):
    n = jnp.maximum(jnp.linalg.norm(x, axis=-1, keepdims=True), eps)
    return x / n * g


if __name__ == "__main__":
    key = jax.random.PRNGKey(0)
    batch, seq, dim = 2, 8, 32
    x = jax.random.normal(key, (batch, seq, dim), dtype=jnp.float32)

    # g as initialized by the module: nn.Parameter(torch.ones(1))
    g = jnp.ones((1,), dtype=jnp.float32)
    out = jax.block_until_ready(pre_scale_norm(x, g))
    ref = _reference(x, g, 1e-5)
    assert out.shape == x.shape, out.shape
    assert jnp.allclose(out, ref, atol=1e-5, rtol=1e-5), "mismatch vs reference (g=1)"

    # Also exercise the learnable-gain path with a non-trivial g.
    g2 = jnp.array([0.5], dtype=jnp.float32)
    out2 = jax.block_until_ready(pre_scale_norm(x, g2))
    ref2 = _reference(x, g2, 1e-5)
    assert jnp.allclose(out2, ref2, atol=1e-5, rtol=1e-5), "mismatch vs reference (g=0.5)"

    print("KERNEL_OK")
</pallas_src>

<mosaic_0001>
module attributes {stable_mosaic.version = 11 : i64} {
  func.func @_prescale_norm_kernel(%arg0: i32, %arg1: memref<1xf32, #tpu.memory_space<smem>>, %arg2: memref<16x32xf32, #tpu.memory_space<vmem>>, %arg3: memref<16x32xf32, #tpu.memory_space<vmem>>) attributes {dimension_semantics = [#tpu.dimension_semantics<parallel>], iteration_bounds = array<i64: 1>, scalar_prefetch = 0 : i64, scratch_operands = 0 : i64, tpu.core_type = #tpu.core_type<tc>, window_params = [{transform_indices = @transform_0, window_bounds = array<i64: 1>}, {transform_indices = @transform_1, window_bounds = array<i64: 16, 32>}, {transform_indices = @transform_2, window_bounds = array<i64: 16, 32>}]} {
    %c0 = arith.constant 0 : index
    %c0_0 = arith.constant 0 : index
    %0 = vector.load %arg2[%c0, %c0_0] : memref<16x32xf32, #tpu.memory_space<vmem>>, vector<16x32xf32>
    %1 = arith.mulf %0, %0 : vector<16x32xf32>
    %cst = arith.constant dense<0.000000e+00> : vector<16xf32>
    %2 = vector.multi_reduction <add>, %1, %cst [1] : vector<16x32xf32> to vector<16xf32>
    %3 = vector.shape_cast %2 : vector<16xf32> to vector<16x1xf32>
    %4 = math.sqrt %3 : vector<16x1xf32>
    %cst_1 = arith.constant 9.99999974E-6 : f32
    %5 = vector.broadcast %cst_1 : f32 to vector<16x1xf32>
    %6 = arith.maximumf %4, %5 : vector<16x1xf32>
    %c0_2 = arith.constant 0 : index
    %7 = memref.load %arg1[%c0_2] : memref<1xf32, #tpu.memory_space<smem>>
    %8 = vector.broadcast %7 : f32 to vector<16x1xf32>
    %9 = arith.divf %8, %6 : vector<16x1xf32>
    %10 = vector.broadcast %9 : vector<16x1xf32> to vector<16x32xf32>
    %11 = arith.mulf %0, %10 : vector<16x32xf32>
    %c0_3 = arith.constant 0 : index
    %c0_4 = arith.constant 0 : index
    %12 = vector.load %arg3[%c0_3, %c0_4] : memref<16x32xf32, #tpu.memory_space<vmem>>, vector<16x32xf32>
    tpu.vector_store %arg3[%c0_3, %c0_4], %11 {strides = array<i32>} : memref<16x32xf32, #tpu.memory_space<vmem>>, vector<16x32xf32>,
    return
  }
  func.func @transform_0(%arg0: i32) -> i32 {
    %c0_i32 = arith.constant 0 : i32
    %c0_i32_0 = arith.constant 0 : i32
    return %c0_i32 : i32
  }
  func.func @transform_1(%arg0: i32) -> (i32, i32) {
    %c0_i32 = arith.constant 0 : i32
    %c0_i32_0 = arith.constant 0 : i32
    return %arg0, %c0_i32 : i32, i32
  }
  func.func @transform_2(%arg0: i32) -> (i32, i32) {
    %c0_i32 = arith.constant 0 : i32
    %c0_i32_0 = arith.constant 0 : i32
    return %arg0, %c0_i32 : i32, i32
  }
}

</mosaic_0001>

<llo_original>
// kernel: tpu_custom_call.1
$region0: #{tpu_custom_call.1}
  #allocation0 [shape = 'u32[]', space=smem, size = 0x4, offset = 0x4, fixed_abs, tag = 'smem constant byte address 0x4 - core index']
  #allocation1 [shape = 'u32[144,128]{1,0:T(1,128)}', space=vmem, size = 0x12000, scoped, tag = 'internal scratch']
  #allocation2 [shape = 'f32[1]{0:T(128)S(6)}', space=smem, size = 0x200, scoped, tag = 'scoped memory for tpu_custom_call.1']
  %s0 = inlined_call_operand.<no memory space> [shape: f32[1], index: 0, kind: input, shape index: {}]
  %s1 = inlined_call_operand.hbm [shape: f32[16,32], index: 1, kind: input, shape index: {}]
  %s2 = inlined_call_operand.hbm [shape: f32[16,32], index: 2, kind: output, shape index: {}]
  %s3 = sld [smem:[#allocation0]]
  $region22: #{tpu_custom_call.1} parent=0
    _
  %s5 = ssub.s32 1, %s3
  %s6 = scalar_select 0, %s5, %s3
  %7 = sst [smem:[#allocation2]] %s0
  $region1: #{tpu_custom_call.1} parent=0
    #allocation3 [shape = 'u8[8192]{0}', space=vmem, size = 0x2000, scoped, tag = 'input window, operand 1, single buffered']
    #allocation4 [shape = 's32[1]{0}', space=sflag, size = 0x4, scoped, tag = 'scoped memory for tpu_custom_call.1']
    #allocation5 [shape = 's32[1]{0}', space=sflag, size = 0x4, scoped, tag = 'scoped memory for tpu_custom_call.1']
    #allocation6 [shape = 'u8[8192]{0}', space=vmem, size = 0x2000, scoped, tag = 'output window, operand 0, single buffered']
    %8 = vsyncpa [#allocation4], 0
    %9 = vsyncpa [#allocation5], 0
    // Predicated region
    $region2: #{tpu_custom_call.1} parent=1 // pred_check
      _
    $region3: #{tpu_custom_call.1} parent=1 // pred_check_branch
      %11 = sbr.rel (0) target = $region5
    $region4: #{tpu_custom_call.1} parent=1 // pred_region
      _
    $region5: #{tpu_custom_call.1} parent=1 // pred_fallthru
      _
    // Predicated region
    $region6: #{tpu_custom_call.1} parent=1 // pred_check
      _
    $region7: #{tpu_custom_call.1} parent=1 // pred_check_branch
      %13 = sbr.rel (0) target = $region9
    $region8: #{tpu_custom_call.1} parent=1 // pred_region
      %s15 = ssub.s32 256, 256
      %16 = vsyncadd [#allocation4], %s15
      %s17 = sshll.u32 [#allocation3], 4
      %s18 = int_to_ptr.vmem [resolvable:$true] %s17
      %23 = dma.hbm_to_vmem [thread:$0]  %s1, 256, %s18, [#allocation4], 128, 128, 8
    $region9: #{tpu_custom_call.1} parent=1 // pred_fallthru
      _
    // Predicated region
    $region10: #{tpu_custom_call.1} parent=1 // pred_check
      _
    $region11: #{tpu_custom_call.1} parent=1 // pred_check_branch
      %25 = sbr.rel (0) target = $region13
    $region12: #{tpu_custom_call.1} parent=1 // pred_region
      %26 = dma.done [#allocation4], 256
    $region13: #{tpu_custom_call.1} parent=1 // pred_fallthru
      _
    %v27 = vld [vmem:[#allocation3] sm:$0xff]
    %v28 = vld [vmem:[#allocation3 + $0x8] sm:$0xff]
    %v29 = vmul.f32 %v27, %v27
    %v30 = vmul.f32 %v28, %v28
    %vm31 = vcmask 261120
    %v32 = vsel %vm31, %v29, 0.0
    %33 = vadd.xlane.f32.xlu0 %v32
    %v34 = vpop.xlane.xlu0 %33
    %v35 = vsel %vm31, %v30, 0.0
    %36 = vadd.xlane.f32.xlu0 %v35
    %v37 = vpop.xlane.xlu0 %36
    %v38 = vrsqrt.pop %v34
    %v39 = vmul.f32 %v34, %v38
    %vm40 = vcmp.eq.f32.partialorder %v34, inf
    %v41 = vsel %vm40, %v34, %v39
    %vm42 = vcmp.eq.f32.partialorder %v34, 0.0
    %v43 = vand.u32 %v34, 2147483648
    %v44 = vsel %vm42, %v43, %v41
    %v45 = vrsqrt.pop %v37
    %v46 = vmul.f32 %v37, %v45
    %vm47 = vcmp.eq.f32.partialorder %v37, inf
    %v48 = vsel %vm47, %v37, %v46
    %vm49 = vcmp.eq.f32.partialorder %v37, 0.0
    %v50 = vand.u32 %v37, 2147483648
    %v51 = vsel %vm49, %v50, %v48
    %v52 = vmax.f32 %v44, 1e-05
    %v53 = vmax.f32 %v51, 1e-05
    %s54 = sld [smem:[#allocation2]]
    %v55 = vstv %s54
    %v56 = vrcp.pop %v52
    %v57 = vmul.f32 %v55, %v56
    %v58 = vrcp.pop %v53
    %v59 = vmul.f32 %v55, %v58
    %v60 = vmul.f32 %v27, %v57
    %v61 = vmul.f32 %v28, %v59
    %62 = vst.msk [vmem:[#allocation6] sm:$0xff] %vm31, %v60
    %63 = vst.msk [vmem:[#allocation6 + $0x8] sm:$0xff] %vm31, %v61
    // Predicated region
    $region14: #{tpu_custom_call.1} parent=1 // pred_check
      _
    $region15: #{tpu_custom_call.1} parent=1 // pred_check_branch
      %65 = sbr.rel (0) target = $region17
    $region16: #{tpu_custom_call.1} parent=1 // pred_region
      %s67 = ssub.s32 256, 256
      %68 = vsyncadd [#allocation5], %s67
      %s69 = sshll.u32 [#allocation6], 4
      %s70 = int_to_ptr.vmem [resolvable:$true] %s69
      %75 = dma.vmem_to_hbm [thread:$0]  %s70, 256, %s2, [#allocation5], 128, 128, 8
    $region17: #{tpu_custom_call.1} parent=1 // pred_fallthru
      _
    // Predicated region
    $region18: #{tpu_custom_call.1} parent=1 // pred_check
      _
    $region19: #{tpu_custom_call.1} parent=1 // pred_check_branch
      %77 = sbr.rel (0) target = $region21
    $region20: #{tpu_custom_call.1} parent=1 // pred_region
      %78 = dma.done [#allocation5], 256
    $region21: #{tpu_custom_call.1} parent=1 // pred_fallthru
      _
    %79 = vsyncpa [#allocation4], 1
    %80 = vsyncpa [#allocation5], 1

</llo_original>
